<compile_context>
chip_gen: v7x
topology: tpu7x:2x2x1
jax: 0.10.0
libtpu: 0.0.40
codegen_flags: <defaults>
</compile_context>

<pallas_src>
import math
import functools

import jax
import jax.numpy as jnp
from jax.experimental import pallas as pl
from jax.experimental.pallas import tpu as pltpu


# ---------------------------------------------------------------------------
# Path 1: one-hot @ table on the MXU (table resident in VMEM, single copy).
# ---------------------------------------------------------------------------
def _onehot_embed_kernel(ids_ref, table_ref, out_ref, *, scale_const):
    # ids_ref:   (TILE, 1) int32   -- token ids for this tile
    # table_ref: (V, D)            -- full table, pinned in VMEM (single buffer)
    # out_ref:   (TILE, D)
    ids = ids_ref[...]
    tile = ids.shape[0]
    vocab = table_ref.shape[0]

    vocab_iota = jax.lax.broadcasted_iota(jnp.int32, (tile, vocab), 1)
    onehot = (vocab_iota == ids).astype(table_ref.dtype)   # exact selection (also in bf16)

    gathered = jnp.dot(onehot, table_ref[...], preferred_element_type=jnp.float32)
    if scale_const != 1.0:                                  # trace-time skip when scale=False
        gathered = gathered * scale_const
    out_ref[...] = gathered.astype(out_ref.dtype)


def _embed_onehot(ids_flat, table, *, scale_const, tile_tokens):
    n_pad = ids_flat.shape[0]
    V, D = table.shape
    grid = n_pad // tile_tokens
    itemsize = table.dtype.itemsize

    # Explicit VMEM budget: 1x table + 2x (ids tile + out tile) + one-hot intermediate.
    est = (V * D * itemsize
           + 2 * tile_tokens * D * itemsize
           + 2 * tile_tokens * 4
           + tile_tokens * V * 4)
    vmem_limit = min(max(int(est) + (8 << 20), 16 << 20), 48 << 20)

    kernel = functools.partial(_onehot_embed_kernel, scale_const=scale_const)
    out = pl.pallas_call(
        kernel,
        out_shape=jax.ShapeDtypeStruct((n_pad, D), table.dtype),
        grid_spec=pltpu.PrefetchScalarGridSpec(
            num_scalar_prefetch=0,
            grid=(grid,),
            in_specs=[
                pl.BlockSpec((tile_tokens, 1), lambda i: (i, 0)),        # ids tile
                pl.BlockSpec(memory_space=pltpu.MemorySpace.VMEM),       # whole table, 1 copy
            ],
            out_specs=pl.BlockSpec((tile_tokens, D), lambda i: (i, 0)),
        ),
        compiler_params=pltpu.CompilerParams(
            dimension_semantics=("parallel",),
            vmem_limit_bytes=vmem_limit),
    )(ids_flat.reshape(n_pad, 1), table)
    return out


# ---------------------------------------------------------------------------
# Path 2: DMA row gather (table stays in HBM, ids scalar-prefetched to SMEM).
# ---------------------------------------------------------------------------
def _gather_embed_kernel(ids_ref, table_hbm, out_ref, sem, *, tile_tokens, scale_const):
    # ids_ref:   (N_pad,) int32 in SMEM (scalar prefetch)
    # table_hbm: (V, D) ref left in HBM (memory_space=pl.ANY)
    # out_ref:   (TILE, D) VMEM output block -- DMA rows straight into it
    base = pl.program_id(0) * tile_tokens

    @pl.loop(0, tile_tokens)
    def _start(t):
        row = ids_ref[base + t]
        pltpu.make_async_copy(
            table_hbm.at[pl.ds(row, 1)], out_ref.at[pl.ds(t, 1)], sem).start()

    @pl.loop(0, tile_tokens)
    def _wait(t):
        # All copies are row-sized and signal the same semaphore; wait row-by-row.
        pltpu.make_async_copy(
            table_hbm.at[pl.ds(0, 1)], out_ref.at[pl.ds(t, 1)], sem).wait()

    if scale_const != 1.0:
        out_ref[...] = out_ref[...] * jnp.asarray(scale_const, out_ref.dtype)


def _embed_gather(ids_flat, table, *, scale_const, tile_tokens):
    n_pad = ids_flat.shape[0]
    V, D = table.shape
    grid = n_pad // tile_tokens

    kernel = functools.partial(_gather_embed_kernel,
                               tile_tokens=tile_tokens, scale_const=scale_const)
    out = pl.pallas_call(
        kernel,
        out_shape=jax.ShapeDtypeStruct((n_pad, D), table.dtype),
        grid_spec=pltpu.PrefetchScalarGridSpec(
            num_scalar_prefetch=1,                         # ids -> SMEM
            grid=(grid,),
            in_specs=[pl.BlockSpec(memory_space=pl.ANY)],  # table stays in HBM
            out_specs=pl.BlockSpec((tile_tokens, D), lambda i, ids: (i, 0)),
            scratch_shapes=[pltpu.SemaphoreType.DMA],
        ),
        compiler_params=pltpu.CompilerParams(
            dimension_semantics=("parallel",)),
    )(ids_flat, table)
    return out


# ---------------------------------------------------------------------------
# Public wrapper (Embeddings.forward equivalent)
# ---------------------------------------------------------------------------
def embeddings_forward(x_ids, table, *, scale=False, method="auto",
                       tile_tokens=None, padding_idx=1):
    """x_ids: int32 [B, S]; table: [V, D] (padding row already zeroed). Returns [B, S, D]."""
    B, S = x_ids.shape
    V, D = table.shape
    N = B * S
    scale_const = float(math.sqrt(D)) if scale else 1.0

    table_bytes = V * D * table.dtype.itemsize
    if method == "auto":
        # Resident-table MXU path only when the table is small; otherwise DMA gather
        # (hard requirement on v7x's 64 MiB VMEM for mid/large vocabs).
        method = "onehot" if table_bytes <= (8 << 20) else "gather"

    if tile_tokens is None:
        tile_tokens = 128 if method == "onehot" else 32
    # Do not over-pad small problems; keep tile a multiple of 8 (sublane).
    tile_tokens = min(tile_tokens, max(8, 8 * pl.cdiv(N, 8)))

    n_pad = tile_tokens * pl.cdiv(N, tile_tokens)
    ids_flat = x_ids.reshape(N).astype(jnp.int32)
    if n_pad != N:
        ids_flat = jnp.concatenate(
            [ids_flat, jnp.full((n_pad - N,), padding_idx, dtype=jnp.int32)])

    if method == "onehot":
        out_flat = _embed_onehot(ids_flat, table,
                                 scale_const=scale_const, tile_tokens=tile_tokens)
    else:
        out_flat = _embed_gather(ids_flat, table,
                                 scale_const=scale_const, tile_tokens=tile_tokens)

    return out_flat[:N].reshape(B, S, D)


def make_embedding_table(key, vocab_size, embedding_dim, padding_idx=1, dtype=jnp.float32):
    # nn.Embedding init: N(0, 1), with the padding_idx row zeroed.
    w = jax.random.normal(key, (vocab_size, embedding_dim), dtype=jnp.float32)
    w = w.at[padding_idx].set(0.0)
    return w.astype(dtype)
    # TODO(synk): `freeze=True` (freeze_params) is a training-time flag with no
    # forward-pass effect; nothing to translate.


if __name__ == "__main__":
    batch, seq = 2, 8
    vocab_size, embedding_dim = 512, 128     # D multiple of 128 -> lane-dense output stores
    padding_idx = 1

    key = jax.random.PRNGKey(0)
    k_tab, k_ids = jax.random.split(key)

    table = make_embedding_table(k_tab, vocab_size, embedding_dim, padding_idx)
    x_ids = jax.random.randint(k_ids, (batch, seq), 0, vocab_size, dtype=jnp.int32)

    # Plain-JAX reference.
    ref = jnp.take(table, x_ids, axis=0)
    ref_scaled = ref * math.sqrt(embedding_dim)

    # 1) MXU one-hot path (table pinned once in VMEM), scale=False (module default).
    out_onehot = jax.block_until_ready(
        embeddings_forward(x_ids, table, scale=False, method="onehot"))
    assert out_onehot.shape == (batch, seq, embedding_dim)
    assert jnp.allclose(out_onehot, ref, atol=1e-5, rtol=1e-5)

    # 2) Same path with scale=True (sqrt(D) applied in-kernel, skipped otherwise).
    out_scaled = jax.block_until_ready(
        embeddings_forward(x_ids, table, scale=True, method="onehot"))
    assert jnp.allclose(out_scaled, ref_scaled, atol=1e-4, rtol=1e-5)

    # 3) HBM DMA row-gather path (the structural path for large vocabularies).
    out_gather = jax.block_until_ready(
        embeddings_forward(x_ids, table, scale=False, method="gather"))
    assert jnp.allclose(out_gather, ref, atol=1e-5, rtol=1e-5)

    # 4) bf16 table: one-hot selection is exact in bf16 (values equal bf16 table rows).
    table_bf16 = table.astype(jnp.bfloat16)
    out_bf16 = jax.block_until_ready(
        embeddings_forward(x_ids, table_bf16, scale=False, method="onehot"))
    ref_bf16 = jnp.take(table_bf16, x_ids, axis=0)
    assert jnp.allclose(out_bf16.astype(jnp.float32), ref_bf16.astype(jnp.float32))

    print("KERNEL_OK")
</pallas_src>

<mosaic_0001>
module attributes {stable_mosaic.version = 11 : i64} {
  func.func @_onehot_embed_kernel(%arg0: i32, %arg1: memref<16x1xi32, #tpu.memory_space<vmem>>, %arg2: memref<512x128xf32, #tpu.memory_space<vmem>>, %arg3: memref<16x128xf32, #tpu.memory_space<vmem>>) attributes {dimension_semantics = [#tpu.dimension_semantics<parallel>], iteration_bounds = array<i64: 1>, scalar_prefetch = 0 : i64, scratch_operands = 0 : i64, tpu.core_type = #tpu.core_type<tc>, window_params = [{transform_indices = @transform_0, window_bounds = array<i64: 16, 1>}, {pipeline_mode = #tpu.pipeline_mode<synchronous>, transform_indices = @transform_1, window_bounds = array<i64: 512, 128>}, {transform_indices = @transform_2, window_bounds = array<i64: 16, 128>}]} {
    %c0 = arith.constant 0 : index
    %c0_0 = arith.constant 0 : index
    %0 = vector.load %arg1[%c0, %c0_0] : memref<16x1xi32, #tpu.memory_space<vmem>>, vector<16x1xi32>
    %1 = tpu.iota {dimensions = array<i32: 1>} : vector<16x512xi32>
    %2 = vector.broadcast %0 : vector<16x1xi32> to vector<16x512xi32>
    %3 = arith.cmpi eq, %1, %2 : vector<16x512xi32>
    %4 = arith.extui %3 : vector<16x512xi1> to vector<16x512xi32>
    %5 = arith.sitofp %4 : vector<16x512xi32> to vector<16x512xf32>
    %c0_1 = arith.constant 0 : index
    %c0_2 = arith.constant 0 : index
    %6 = vector.load %arg2[%c0_1, %c0_2] : memref<512x128xf32, #tpu.memory_space<vmem>>, vector<512x128xf32>
    %cst = arith.constant dense<0.000000e+00> : vector<16x128xf32>
    %7 = tpu.matmul %5, %6, %cst {dimension_numbers = #tpu.dot_dimension_numbers<[1], [0], [0], [1], [0, 0, 1, 1], [], []>} : vector<16x512xf32>, vector<512x128xf32>, vector<16x128xf32> -> vector<16x128xf32>
    %c0_3 = arith.constant 0 : index
    %c0_4 = arith.constant 0 : index
    %8 = vector.load %arg3[%c0_3, %c0_4] : memref<16x128xf32, #tpu.memory_space<vmem>>, vector<16x128xf32>
    tpu.vector_store %arg3[%c0_3, %c0_4], %7 {strides = array<i32>} : memref<16x128xf32, #tpu.memory_space<vmem>>, vector<16x128xf32>,
    return
  }
  func.func @transform_0(%arg0: i32) -> (i32, i32) {
    %c0_i32 = arith.constant 0 : i32
    %c0_i32_0 = arith.constant 0 : i32
    return %arg0, %c0_i32 : i32, i32
  }
  func.func @transform_1(%arg0: i32) -> (i32, i32) {
    %c0_i32 = arith.constant 0 : i32
    %c0_i32_0 = arith.constant 0 : i32
    %c0_i32_1 = arith.constant 0 : i32
    return %c0_i32, %c0_i32_0 : i32, i32
  }
  func.func @transform_2(%arg0: i32) -> (i32, i32) {
    %c0_i32 = arith.constant 0 : i32
    %c0_i32_0 = arith.constant 0 : i32
    return %arg0, %c0_i32 : i32, i32
  }
}

</mosaic_0001>

<llo_original>
// kernel: tpu_custom_call.1
$region0: #{tpu_custom_call.1}
  #allocation0 [shape = 'u32[]', space=smem, size = 0x4, offset = 0x4, fixed_abs, tag = 'smem constant byte address 0x4 - core index']
  #allocation1 [shape = 'u32[144,128]{1,0:T(1,128)}', space=vmem, size = 0x12000, scoped, tag = 'internal scratch']
  %s0 = inlined_call_operand.vmem [shape: s32[16,1], index: 0, kind: input, shape index: {}]
  %s1 = inlined_call_operand.hbm [shape: f32[512,128], index: 1, kind: input, shape index: {}]
  %s2 = inlined_call_operand.hbm [shape: f32[16,128], index: 2, kind: output, shape index: {}]
  %s3 = sld [smem:[#allocation0]]
  $region22: #{tpu_custom_call.1} parent=0
    _
  %s5 = ssub.s32 1, %s3
  %s6 = scalar_select 0, %s5, %s3
  $region1: #{tpu_custom_call.1} parent=0
    #allocation2 [shape = 'u8[262144]{0}', space=vmem, size = 0x40000, scoped, tag = 'input window, operand 1, single buffered']
    #allocation3 [shape = 's32[1]{0}', space=sflag, size = 0x4, scoped, tag = 'scoped memory for tpu_custom_call.1']
    #allocation4 [shape = 's32[1]{0}', space=sflag, size = 0x4, scoped, tag = 'scoped memory for tpu_custom_call.1']
    #allocation5 [shape = 'u8[8192]{0}', space=vmem, size = 0x2000, scoped, tag = 'output window, operand 0, single buffered']
    %7 = vsyncpa [#allocation3], 0
    %8 = vsyncpa [#allocation4], 0
    // Predicated region
    $region2: #{tpu_custom_call.1} parent=1 // pred_check
      _
    $region3: #{tpu_custom_call.1} parent=1 // pred_check_branch
      %10 = sbr.rel (0) target = $region5
    $region4: #{tpu_custom_call.1} parent=1 // pred_region
      _
    $region5: #{tpu_custom_call.1} parent=1 // pred_fallthru
      _
    // Predicated region
    $region6: #{tpu_custom_call.1} parent=1 // pred_check
      _
    $region7: #{tpu_custom_call.1} parent=1 // pred_check_branch
      %12 = sbr.rel (0) target = $region9
    $region8: #{tpu_custom_call.1} parent=1 // pred_region
      %s14 = ssub.s32 8192, 8192
      %15 = vsyncadd [#allocation3], %s14
      %s16 = sshll.u32 [#allocation2], 4
      %s17 = int_to_ptr.vmem [resolvable:$true] %s16
      %22 = dma.hbm_to_vmem [thread:$0]  %s1, 8192, %s17, [#allocation3], 128, 128, 8
    $region9: #{tpu_custom_call.1} parent=1 // pred_fallthru
      _
    // Predicated region
    $region10: #{tpu_custom_call.1} parent=1 // pred_check
      _
    $region11: #{tpu_custom_call.1} parent=1 // pred_check_branch
      %24 = sbr.rel (0) target = $region13
    $region12: #{tpu_custom_call.1} parent=1 // pred_region
      %25 = dma.done [#allocation3], 8192
    $region13: #{tpu_custom_call.1} parent=1 // pred_fallthru
      _
    %v26 = vld [vmem:[%s0] sm:$0xff]
    %v27 = vld [vmem:[%s0 + $0x8] sm:$0xff]
    %v28 = vlaneseq
    %v29 = vand.u32 %v28, 127
    %v30 = vadd.s32 %v29, 128
    %v31 = vadd.s32 %v29, 256
    %v32 = vadd.s32 %v29, 384
    %33 = vset.pattern.permute.xlu0 0
    %34 = vperm.xlu0 %33, %v26
    %v35 = vpop.permute.xlu0 %34
    %36 = vset.pattern.permute.xlu0 0
    %37 = vperm.xlu0 %36, %v27
    %v38 = vpop.permute.xlu0 %37
    %vm39 = vcmp.eq.s32.totalorder %v29, %v35
    %vm40 = vcmp.eq.s32.totalorder %v30, %v35
    %vm41 = vcmp.eq.s32.totalorder %v31, %v35
    %vm42 = vcmp.eq.s32.totalorder %v32, %v35
    %vm43 = vcmp.eq.s32.totalorder %v29, %v38
    %vm44 = vcmp.eq.s32.totalorder %v30, %v38
    %vm45 = vcmp.eq.s32.totalorder %v31, %v38
    %vm46 = vcmp.eq.s32.totalorder %v32, %v38
    %v47 = vsel %vm39, 1, 0
    %v48 = vsel %vm40, 1, 0
    %v49 = vsel %vm41, 1, 0
    %v50 = vsel %vm42, 1, 0
    %v51 = vsel %vm43, 1, 0
    %v52 = vsel %vm44, 1, 0
    %v53 = vsel %vm45, 1, 0
    %v54 = vsel %vm46, 1, 0
    %v55 = vcvt.s32.f32 %v47
    %v56 = vcvt.s32.f32 %v48
    %v57 = vcvt.s32.f32 %v49
    %v58 = vcvt.s32.f32 %v50
    %v59 = vcvt.s32.f32 %v51
    %v60 = vcvt.s32.f32 %v52
    %v61 = vcvt.s32.f32 %v53
    %v62 = vcvt.s32.f32 %v54
    %v63 = vld [vmem:[#allocation2] sm:$0xff]
    %v64 = vld [vmem:[#allocation2 + $0x8] sm:$0xff]
    %v65 = vld [vmem:[#allocation2 + $0x10] sm:$0xff]
    %v66 = vld [vmem:[#allocation2 + $0x18] sm:$0xff]
    %v67 = vld [vmem:[#allocation2 + $0x20] sm:$0xff]
    %v68 = vld [vmem:[#allocation2 + $0x28] sm:$0xff]
    %v69 = vld [vmem:[#allocation2 + $0x30] sm:$0xff]
    %v70 = vld [vmem:[#allocation2 + $0x38] sm:$0xff]
    %v71 = vld [vmem:[#allocation2 + $0x40] sm:$0xff]
    %v72 = vld [vmem:[#allocation2 + $0x48] sm:$0xff]
    %v73 = vld [vmem:[#allocation2 + $0x50] sm:$0xff]
    %v74 = vld [vmem:[#allocation2 + $0x58] sm:$0xff]
    %v75 = vld [vmem:[#allocation2 + $0x60] sm:$0xff]
    %v76 = vld [vmem:[#allocation2 + $0x68] sm:$0xff]
    %v77 = vld [vmem:[#allocation2 + $0x70] sm:$0xff]
    %v78 = vld [vmem:[#allocation2 + $0x78] sm:$0xff]
    %v79 = vld [vmem:[#allocation2 + $0x80] sm:$0xff]
    %v80 = vld [vmem:[#allocation2 + $0x88] sm:$0xff]
    %v81 = vld [vmem:[#allocation2 + $0x90] sm:$0xff]
    %v82 = vld [vmem:[#allocation2 + $0x98] sm:$0xff]
    %v83 = vld [vmem:[#allocation2 + $0xa0] sm:$0xff]
    %v84 = vld [vmem:[#allocation2 + $0xa8] sm:$0xff]
    %v85 = vld [vmem:[#allocation2 + $0xb0] sm:$0xff]
    %v86 = vld [vmem:[#allocation2 + $0xb8] sm:$0xff]
    %v87 = vld [vmem:[#allocation2 + $0xc0] sm:$0xff]
    %v88 = vld [vmem:[#allocation2 + $0xc8] sm:$0xff]
    %v89 = vld [vmem:[#allocation2 + $0xd0] sm:$0xff]
    %v90 = vld [vmem:[#allocation2 + $0xd8] sm:$0xff]
    %v91 = vld [vmem:[#allocation2 + $0xe0] sm:$0xff]
    %v92 = vld [vmem:[#allocation2 + $0xe8] sm:$0xff]
    %v93 = vld [vmem:[#allocation2 + $0xf0] sm:$0xff]
    %v94 = vld [vmem:[#allocation2 + $0xf8] sm:$0xff]
    %v95 = vld [vmem:[#allocation2 + $0x100] sm:$0xff]
    %v96 = vld [vmem:[#allocation2 + $0x108] sm:$0xff]
    %v97 = vld [vmem:[#allocation2 + $0x110] sm:$0xff]
    %v98 = vld [vmem:[#allocation2 + $0x118] sm:$0xff]
    %v99 = vld [vmem:[#allocation2 + $0x120] sm:$0xff]
    %v100 = vld [vmem:[#allocation2 + $0x128] sm:$0xff]
    %v101 = vld [vmem:[#allocation2 + $0x130] sm:$0xff]
    %v102 = vld [vmem:[#allocation2 + $0x138] sm:$0xff]
    %v103 = vld [vmem:[#allocation2 + $0x140] sm:$0xff]
    %v104 = vld [vmem:[#allocation2 + $0x148] sm:$0xff]
    %v105 = vld [vmem:[#allocation2 + $0x150] sm:$0xff]
    %v106 = vld [vmem:[#allocation2 + $0x158] sm:$0xff]
    %v107 = vld [vmem:[#allocation2 + $0x160] sm:$0xff]
    %v108 = vld [vmem:[#allocation2 + $0x168] sm:$0xff]
    %v109 = vld [vmem:[#allocation2 + $0x170] sm:$0xff]
    %v110 = vld [vmem:[#allocation2 + $0x178] sm:$0xff]
    %v111 = vld [vmem:[#allocation2 + $0x180] sm:$0xff]
    %v112 = vld [vmem:[#allocation2 + $0x188] sm:$0xff]
    %v113 = vld [vmem:[#allocation2 + $0x190] sm:$0xff]
    %v114 = vld [vmem:[#allocation2 + $0x198] sm:$0xff]
    %v115 = vld [vmem:[#allocation2 + $0x1a0] sm:$0xff]
    %v116 = vld [vmem:[#allocation2 + $0x1a8] sm:$0xff]
    %v117 = vld [vmem:[#allocation2 + $0x1b0] sm:$0xff]
    %v118 = vld [vmem:[#allocation2 + $0x1b8] sm:$0xff]
    %v119 = vld [vmem:[#allocation2 + $0x1c0] sm:$0xff]
    %v120 = vld [vmem:[#allocation2 + $0x1c8] sm:$0xff]
    %v121 = vld [vmem:[#allocation2 + $0x1d0] sm:$0xff]
    %v122 = vld [vmem:[#allocation2 + $0x1d8] sm:$0xff]
    %v123 = vld [vmem:[#allocation2 + $0x1e0] sm:$0xff]
    %v124 = vld [vmem:[#allocation2 + $0x1e8] sm:$0xff]
    %v125 = vld [vmem:[#allocation2 + $0x1f0] sm:$0xff]
    %v126 = vld [vmem:[#allocation2 + $0x1f8] sm:$0xff]
    %127 = vmatprep.subr.mxu0 0.0
    %128 = vmatpush1.msra.mxu0 %v63
    %129 = vmatprep.subr.mxu0 0.0
    %130 = vmatpush1.msra.mxu0 %v64
    %131 = vmatprep.subr.mxu0 0.0
    %132 = vmatpush1.msra.mxu0 %v65
    %133 = vmatprep.subr.mxu0 0.0
    %134 = vmatpush1.msra.mxu0 %v66
    %135 = vmatprep.subr.mxu0 0.0
    %136 = vmatpush1.msra.mxu0 %v67
    %137 = vmatprep.subr.mxu0 0.0
    %138 = vmatpush1.msra.mxu0 %v68
    %139 = vmatprep.subr.mxu0 0.0
    %140 = vmatpush1.msra.mxu0 %v69
    %141 = vmatprep.subr.mxu0 0.0
    %142 = vmatpush1.msra.mxu0 %v70
    %143 = vmatprep.subr.mxu0 0.0
    %144 = vmatpush1.msra.mxu0 %v71
    %145 = vmatprep.subr.mxu0 0.0
    %146 = vmatpush1.msra.mxu0 %v72
    %147 = vmatprep.subr.mxu0 0.0
    %148 = vmatpush1.msra.mxu0 %v73
    %149 = vmatprep.subr.mxu0 0.0
    %150 = vmatpush1.msra.mxu0 %v74
    %151 = vmatprep.subr.mxu0 0.0
    %152 = vmatpush1.msra.mxu0 %v75
    %153 = vmatprep.subr.mxu0 0.0
    %154 = vmatpush1.msra.mxu0 %v76
    %155 = vmatprep.subr.mxu0 0.0
    %156 = vmatpush1.msra.mxu0 %v77
    %157 = vmatprep.subr.mxu0 0.0
    %158 = vmatpush1.msra.mxu0 %v78
    %159 = vmatprep.subr.mxu0 0.0
    %160 = vmatpush1.msra.mxu0 %v79
    %161 = vmatprep.subr.mxu0 0.0
    %162 = vmatpush1.msra.mxu0 %v80
    %163 = vmatprep.subr.mxu0 0.0
    %164 = vmatpush1.msra.mxu0 %v81
    %165 = vmatprep.subr.mxu0 0.0
    %166 = vmatpush1.msra.mxu0 %v82
    %167 = vmatprep.subr.mxu0 0.0
    %168 = vmatpush1.msra.mxu0 %v83
    %169 = vmatprep.subr.mxu0 0.0
    %170 = vmatpush1.msra.mxu0 %v84
    %171 = vmatprep.subr.mxu0 0.0
    %172 = vmatpush1.msra.mxu0 %v85
    %173 = vmatprep.subr.mxu0 0.0
    %174 = vmatpush1.msra.mxu0 %v86
    %175 = vmatprep.subr.mxu0 0.0
    %176 = vmatpush1.msra.mxu0 %v87
    %177 = vmatprep.subr.mxu0 0.0
    %178 = vmatpush1.msra.mxu0 %v88
    %179 = vmatprep.subr.mxu0 0.0
    %180 = vmatpush1.msra.mxu0 %v89
    %181 = vmatprep.subr.mxu0 0.0
    %182 = vmatpush1.msra.mxu0 %v90
    %183 = vmatprep.subr.mxu0 0.0
    %184 = vmatpush1.msra.mxu0 %v91
    %185 = vmatprep.subr.mxu0 0.0
    %186 = vmatpush1.msra.mxu0 %v92
    %187 = vmatprep.subr.mxu0 0.0
    %188 = vmatpush1.msra.mxu0 %v93
    %189 = vmatprep.subr.mxu0 0.0
    %190 = vmatpush1.msra.mxu0 %v94
    %191 = vmatprep.mubr.f32.mxu0 %v56
    %192 = vmatmul.mubr.f32.gmra.mrb[0].mxu0 %v55
    %v193 = vpop.f32.mrb[0].mxu0
    %v194 = vadd.f32 0.0, %v193
    %v195 = vpop.f32.mrb[0].mxu0
    %196 = vmatprep.mubr.f32.mxu0 %v60
    %197 = vmatmul.mubr.f32.gmra.mrb[0].mxu0 %v59
    %v198 = vpop.f32.mrb[0].mxu0
    %v199 = vadd.f32 0.0, %v198
    %v200 = vpop.f32.mrb[0].mxu0
    %201 = vdwg.mxu0
    %202 = vmatprep.subr.mxu0 0.0
    %203 = vmatpush1.msra.mxu0 %v95
    %204 = vmatprep.subr.mxu0 0.0
    %205 = vmatpush1.msra.mxu0 %v96
    %206 = vmatprep.subr.mxu0 0.0
    %207 = vmatpush1.msra.mxu0 %v97
    %208 = vmatprep.subr.mxu0 0.0
    %209 = vmatpush1.msra.mxu0 %v98
    %210 = vmatprep.subr.mxu0 0.0
    %211 = vmatpush1.msra.mxu0 %v99
    %212 = vmatprep.subr.mxu0 0.0
    %213 = vmatpush1.msra.mxu0 %v100
    %214 = vmatprep.subr.mxu0 0.0
    %215 = vmatpush1.msra.mxu0 %v101
    %216 = vmatprep.subr.mxu0 0.0
    %217 = vmatpush1.msra.mxu0 %v102
    %218 = vmatprep.subr.mxu0 0.0
    %219 = vmatpush1.msra.mxu0 %v103
    %220 = vmatprep.subr.mxu0 0.0
    %221 = vmatpush1.msra.mxu0 %v104
    %222 = vmatprep.subr.mxu0 0.0
    %223 = vmatpush1.msra.mxu0 %v105
    %224 = vmatprep.subr.mxu0 0.0
    %225 = vmatpush1.msra.mxu0 %v106
    %226 = vmatprep.subr.mxu0 0.0
    %227 = vmatpush1.msra.mxu0 %v107
    %228 = vmatprep.subr.mxu0 0.0
    %229 = vmatpush1.msra.mxu0 %v108
    %230 = vmatprep.subr.mxu0 0.0
    %231 = vmatpush1.msra.mxu0 %v109
    %232 = vmatprep.subr.mxu0 0.0
    %233 = vmatpush1.msra.mxu0 %v110
    %234 = vmatprep.subr.mxu0 0.0
    %235 = vmatpush1.msra.mxu0 %v111
    %236 = vmatprep.subr.mxu0 0.0
    %237 = vmatpush1.msra.mxu0 %v112
    %238 = vmatprep.subr.mxu0 0.0
    %239 = vmatpush1.msra.mxu0 %v113
    %240 = vmatprep.subr.mxu0 0.0
    %241 = vmatpush1.msra.mxu0 %v114
    %242 = vmatprep.subr.mxu0 0.0
    %243 = vmatpush1.msra.mxu0 %v115
    %244 = vmatprep.subr.mxu0 0.0
    %245 = vmatpush1.msra.mxu0 %v116
    %246 = vmatprep.subr.mxu0 0.0
    %247 = vmatpush1.msra.mxu0 %v117
    %248 = vmatprep.subr.mxu0 0.0
    %249 = vmatpush1.msra.mxu0 %v118
    %250 = vmatprep.subr.mxu0 0.0
    %251 = vmatpush1.msra.mxu0 %v119
    %252 = vmatprep.subr.mxu0 0.0
    %253 = vmatpush1.msra.mxu0 %v120
    %254 = vmatprep.subr.mxu0 0.0
    %255 = vmatpush1.msra.mxu0 %v121
    %256 = vmatprep.subr.mxu0 0.0
    %257 = vmatpush1.msra.mxu0 %v122
    %258 = vmatprep.subr.mxu0 0.0
    %259 = vmatpush1.msra.mxu0 %v123
    %260 = vmatprep.subr.mxu0 0.0
    %261 = vmatpush1.msra.mxu0 %v124
    %262 = vmatprep.subr.mxu0 0.0
    %263 = vmatpush1.msra.mxu0 %v125
    %264 = vmatprep.subr.mxu0 0.0
    %265 = vmatpush1.msra.mxu0 %v126
    %266 = vmatprep.mubr.f32.mxu0 %v58
    %267 = vmatmul.mubr.f32.gmra.mrb[0].mxu0 %v57
    %v268 = vpop.f32.mrb[0].mxu0
    %v269 = vadd.f32 %v194, %v268
    %v270 = vpop.f32.mrb[0].mxu0
    %271 = vmatprep.mubr.f32.mxu0 %v62
    %272 = vmatmul.mubr.f32.gmra.mrb[0].mxu0 %v61
    %v273 = vpop.f32.mrb[0].mxu0
    %v274 = vadd.f32 %v199, %v273
    %v275 = vpop.f32.mrb[0].mxu0
    %276 = vdwg.mxu0
    %277 = vst [vmem:[#allocation5] sm:$0xff] %v269
    %278 = vst [vmem:[#allocation5 + $0x8] sm:$0xff] %v274
    // Predicated region
    $region14: #{tpu_custom_call.1} parent=1 // pred_check
      _
    $region15: #{tpu_custom_call.1} parent=1 // pred_check_branch
      %280 = sbr.rel (0) target = $region17
    $region16: #{tpu_custom_call.1} parent=1 // pred_region
      %s282 = ssub.s32 256, 256
      %283 = vsyncadd [#allocation4], %s282
      %s284 = sshll.u32 [#allocation5], 4
      %s285 = int_to_ptr.vmem [resolvable:$true] %s284
      %290 = dma.vmem_to_hbm [thread:$0]  %s285, 256, %s2, [#allocation4], 128, 128, 8
    $region17: #{tpu_custom_call.1} parent=1 // pred_fallthru
      _
    // Predicated region
    $region18: #{tpu_custom_call.1} parent=1 // pred_check
      _
    $region19: #{tpu_custom_call.1} parent=1 // pred_check_branch
      %292 = sbr.rel (0) target = $region21
    $region20: #{tpu_custom_call.1} parent=1 // pred_region
      %293 = dma.done [#allocation4], 256
    $region21: #{tpu_custom_call.1} parent=1 // pred_fallthru
      _
    %294 = vsyncpa [#allocation3], 1
    %295 = vsyncpa [#allocation4], 1

</llo_original>
